<compile_context>
chip_gen: v6e
topology: v6e:2x2x1
jax: 0.10.0
libtpu: 0.0.40
codegen_flags: <defaults>
</compile_context>

<pallas_src>
import jax
import jax.numpy as jnp
from jax.experimental import pallas as pl
from jax.experimental.pallas import tpu as pltpu


def hier_predict_kernel(x_ref, w1_ref, b1_ref, w2_ref, b2_ref, w3_ref, b3_ref,
                        o_ref):
    x = x_ref[...]

    # ff1: Linear -> ReLU -> Dropout(identity at inference)
    h1 = jnp.dot(x, w1_ref[...], preferred_element_type=jnp.float32) + b1_ref[...]
    h1 = jnp.maximum(h1, 0.0)

    # ff2: Linear -> ReLU -> Dropout(identity at inference)
    h2 = jnp.dot(h1, w2_ref[...], preferred_element_type=jnp.float32) + b2_ref[...]
    h2 = jnp.maximum(h2, 0.0)

    # ff3: Linear -> Softmax over the label (last) axis.
    logits = jnp.dot(h2, w3_ref[...], preferred_element_type=jnp.float32) + b3_ref[...]
    m = jnp.max(logits, axis=-1, keepdims=True)
    e = jnp.exp(logits - m)
    denom = jnp.sum(e, axis=-1, keepdims=True)
    # Exact divide: rows sum to 1 at f32 precision; cost is negligible (mem-bound).
    o_ref[...] = (e / denom).astype(o_ref.dtype)


def hier_predict(x, w1, b1, w2, b2, w3, b3, *, tm=1024):
    """Fused HierPredict forward.  x: [B, D] f32.  Weights [in, out], biases [1, out]."""
    B, D = x.shape
    L = w3.shape[1]

    # Batch tile: sublane-aligned, capped by the (sublane-rounded) batch for small B.
    tm_req = max(8, (tm // 8) * 8)
    tm_eff = min(tm_req, pl.cdiv(B, 8) * 8)
    grid = (pl.cdiv(B, tm_eff),)  # ragged last block handled by Pallas (no x pad copy)

    # Weights/biases: constant block index -> DMA'd once, VMEM-resident.
    resident = lambda shape: pl.BlockSpec(shape, lambda i: (0, 0))

    # Real (unpadded) traffic / work for XLA's scheduler.
    flops = 2 * B * D * (D + D + L)
    bytes_accessed = 4 * (B * D                    # x
                          + 2 * D * D + D * L      # W1, W2, W3
                          + 2 * D + L              # biases
                          + B * L)                 # out

    out = pl.pallas_call(
        hier_predict_kernel,
        out_shape=jax.ShapeDtypeStruct((B, L), jnp.float32),
        grid=grid,
        in_specs=[
            pl.BlockSpec((tm_eff, D), lambda i: (i, 0)),  # x tile (pipelined)
            resident((D, D)),                             # W1
            resident((1, D)),                             # b1
            resident((D, D)),                             # W2
            resident((1, D)),                             # b2
            resident((D, L)),                             # W3 (true label width)
            resident((1, L)),                             # b3
        ],
        out_specs=pl.BlockSpec((tm_eff, L), lambda i: (i, 0)),
        compiler_params=pltpu.CompilerParams(
            dimension_semantics=("parallel",)),
        cost_estimate=pl.CostEstimate(
            flops=flops, transcendentals=B * L, bytes_accessed=bytes_accessed),
    )(x, w1, b1, w2, b2, w3, b3)

    return out


def reference(x, w1, b1, w2, b2, w3, b3):
    h1 = jnp.maximum(x @ w1 + b1, 0.0)
    h2 = jnp.maximum(h1 @ w2 + b2, 0.0)
    return jax.nn.softmax(h2 @ w3 + b3, axis=1)


if __name__ == "__main__":
    # Small, deterministic setup: batch=8, latent_size=32, label_size=8.
    B, LATENT, LABEL = 8, 32, 8

    key = jax.random.PRNGKey(0)
    kx, k1, k2, k3, kb1, kb2, kb3, kx2 = jax.random.split(key, 8)

    x = jax.random.normal(kx, (B, LATENT), dtype=jnp.float32)

    # Deterministic parameter init (synthetic; mimics PyTorch Linear fan-in scaling).
    s_lat = 1.0 / jnp.sqrt(jnp.float32(LATENT))
    w1 = jax.random.uniform(k1, (LATENT, LATENT), jnp.float32, -s_lat, s_lat)
    b1 = jax.random.uniform(kb1, (1, LATENT), jnp.float32, -s_lat, s_lat)
    w2 = jax.random.uniform(k2, (LATENT, LATENT), jnp.float32, -s_lat, s_lat)
    b2 = jax.random.uniform(kb2, (1, LATENT), jnp.float32, -s_lat, s_lat)
    w3 = jax.random.uniform(k3, (LATENT, LABEL), jnp.float32, -s_lat, s_lat)
    b3 = jax.random.uniform(kb3, (1, LABEL), jnp.float32, -s_lat, s_lat)

    # --- Small case (single ragged tile: tm_eff = 8 == B). ----------------------
    out = hier_predict(x, w1, b1, w2, b2, w3, b3)
    out = jax.block_until_ready(out)

    ref = reference(x, w1, b1, w2, b2, w3, b3)
    assert out.shape == (B, LABEL)
    assert jnp.allclose(out, ref, atol=1e-3, rtol=1e-3), "mismatch vs reference (small)"
    assert jnp.allclose(jnp.sum(out, axis=1), 1.0, atol=1e-4), "softmax rows must sum to 1"

    # --- Larger, non-multiple-of-8 batch: exercises the pipelined multi-tile grid
    #     with VMEM-resident weights and the ragged last block (no batch padding). -
    B2 = 300
    x2 = jax.random.normal(kx2, (B2, LATENT), dtype=jnp.float32)
    out2 = jax.block_until_ready(
        hier_predict(x2, w1, b1, w2, b2, w3, b3, tm=128))
    ref2 = reference(x2, w1, b1, w2, b2, w3, b3)
    assert out2.shape == (B2, LABEL)
    assert jnp.allclose(out2, ref2, atol=1e-3, rtol=1e-3), "mismatch vs reference (batched)"
    assert jnp.allclose(jnp.sum(out2, axis=1), 1.0, atol=1e-4), "softmax rows must sum to 1"

    print("KERNEL_OK")
</pallas_src>

<mosaic_0001>
module attributes {stable_mosaic.version = 11 : i64} {
  func.func @hier_predict_kernel(%arg0: i32, %arg1: memref<8x32xf32, #tpu.memory_space<vmem>>, %arg2: memref<32x32xf32, #tpu.memory_space<vmem>>, %arg3: memref<1x32xf32, #tpu.memory_space<vmem>>, %arg4: memref<32x32xf32, #tpu.memory_space<vmem>>, %arg5: memref<1x32xf32, #tpu.memory_space<vmem>>, %arg6: memref<32x8xf32, #tpu.memory_space<vmem>>, %arg7: memref<1x8xf32, #tpu.memory_space<vmem>>, %arg8: memref<8x8xf32, #tpu.memory_space<vmem>>) attributes {dimension_semantics = [#tpu.dimension_semantics<parallel>], iteration_bounds = array<i64: 1>, scalar_prefetch = 0 : i64, scratch_operands = 0 : i64, tpu.core_type = #tpu.core_type<tc>, window_params = [{transform_indices = @transform_0, window_bounds = array<i64: 8, 32>}, {pipeline_mode = #tpu.pipeline_mode<synchronous>, transform_indices = @transform_1, window_bounds = array<i64: 32, 32>}, {pipeline_mode = #tpu.pipeline_mode<synchronous>, transform_indices = @transform_2, window_bounds = array<i64: 1, 32>}, {pipeline_mode = #tpu.pipeline_mode<synchronous>, transform_indices = @transform_3, window_bounds = array<i64: 32, 32>}, {pipeline_mode = #tpu.pipeline_mode<synchronous>, transform_indices = @transform_4, window_bounds = array<i64: 1, 32>}, {pipeline_mode = #tpu.pipeline_mode<synchronous>, transform_indices = @transform_5, window_bounds = array<i64: 32, 8>}, {pipeline_mode = #tpu.pipeline_mode<synchronous>, transform_indices = @transform_6, window_bounds = array<i64: 1, 8>}, {transform_indices = @transform_7, window_bounds = array<i64: 8, 8>}]} {
    %c0 = arith.constant 0 : index
    %c0_0 = arith.constant 0 : index
    %0 = vector.load %arg1[%c0, %c0_0] : memref<8x32xf32, #tpu.memory_space<vmem>>, vector<8x32xf32>
    %c0_1 = arith.constant 0 : index
    %c0_2 = arith.constant 0 : index
    %1 = vector.load %arg2[%c0_1, %c0_2] : memref<32x32xf32, #tpu.memory_space<vmem>>, vector<32x32xf32>
    %cst = arith.constant dense<0.000000e+00> : vector<8x32xf32>
    %2 = tpu.matmul %0, %1, %cst {dimension_numbers = #tpu.dot_dimension_numbers<[1], [0], [0], [1], [0, 0, 1, 1], [], []>} : vector<8x32xf32>, vector<32x32xf32>, vector<8x32xf32> -> vector<8x32xf32>
    %c0_3 = arith.constant 0 : index
    %c0_4 = arith.constant 0 : index
    %3 = vector.load %arg3[%c0_3, %c0_4] : memref<1x32xf32, #tpu.memory_space<vmem>>, vector<1x32xf32>
    %4 = vector.broadcast %3 : vector<1x32xf32> to vector<8x32xf32>
    %5 = arith.addf %2, %4 : vector<8x32xf32>
    %cst_5 = arith.constant 0.000000e+00 : f32
    %6 = vector.broadcast %cst_5 : f32 to vector<8x32xf32>
    %7 = arith.maximumf %5, %6 : vector<8x32xf32>
    %c0_6 = arith.constant 0 : index
    %c0_7 = arith.constant 0 : index
    %8 = vector.load %arg4[%c0_6, %c0_7] : memref<32x32xf32, #tpu.memory_space<vmem>>, vector<32x32xf32>
    %cst_8 = arith.constant dense<0.000000e+00> : vector<8x32xf32>
    %9 = tpu.matmul %7, %8, %cst_8 {dimension_numbers = #tpu.dot_dimension_numbers<[1], [0], [0], [1], [0, 0, 1, 1], [], []>} : vector<8x32xf32>, vector<32x32xf32>, vector<8x32xf32> -> vector<8x32xf32>
    %c0_9 = arith.constant 0 : index
    %c0_10 = arith.constant 0 : index
    %10 = vector.load %arg5[%c0_9, %c0_10] : memref<1x32xf32, #tpu.memory_space<vmem>>, vector<1x32xf32>
    %11 = vector.broadcast %10 : vector<1x32xf32> to vector<8x32xf32>
    %12 = arith.addf %9, %11 : vector<8x32xf32>
    %cst_11 = arith.constant 0.000000e+00 : f32
    %13 = vector.broadcast %cst_11 : f32 to vector<8x32xf32>
    %14 = arith.maximumf %12, %13 : vector<8x32xf32>
    %c0_12 = arith.constant 0 : index
    %c0_13 = arith.constant 0 : index
    %15 = vector.load %arg6[%c0_12, %c0_13] : memref<32x8xf32, #tpu.memory_space<vmem>>, vector<32x8xf32>
    %cst_14 = arith.constant dense<0.000000e+00> : vector<8x8xf32>
    %16 = tpu.matmul %14, %15, %cst_14 {dimension_numbers = #tpu.dot_dimension_numbers<[1], [0], [0], [1], [0, 0, 1, 1], [], []>} : vector<8x32xf32>, vector<32x8xf32>, vector<8x8xf32> -> vector<8x8xf32>
    %c0_15 = arith.constant 0 : index
    %c0_16 = arith.constant 0 : index
    %17 = vector.load %arg7[%c0_15, %c0_16] : memref<1x8xf32, #tpu.memory_space<vmem>>, vector<1x8xf32>
    %18 = vector.broadcast %17 : vector<1x8xf32> to vector<8x8xf32>
    %19 = arith.addf %16, %18 : vector<8x8xf32>
    %cst_17 = arith.constant dense<0xFF800000> : vector<8xf32>
    %20 = vector.multi_reduction <maximumf>, %19, %cst_17 [1] : vector<8x8xf32> to vector<8xf32>
    %21 = vector.shape_cast %20 : vector<8xf32> to vector<8x1xf32>
    %22 = vector.broadcast %21 : vector<8x1xf32> to vector<8x8xf32>
    %23 = arith.subf %19, %22 : vector<8x8xf32>
    %24 = math.exp %23 : vector<8x8xf32>
    %cst_18 = arith.constant dense<0.000000e+00> : vector<8xf32>
    %25 = vector.multi_reduction <add>, %24, %cst_18 [1] : vector<8x8xf32> to vector<8xf32>
    %26 = vector.shape_cast %25 : vector<8xf32> to vector<8x1xf32>
    %27 = vector.broadcast %26 : vector<8x1xf32> to vector<8x8xf32>
    %28 = arith.divf %24, %27 : vector<8x8xf32>
    %c0_19 = arith.constant 0 : index
    %c0_20 = arith.constant 0 : index
    %29 = vector.load %arg8[%c0_19, %c0_20] : memref<8x8xf32, #tpu.memory_space<vmem>>, vector<8x8xf32>
    tpu.vector_store %arg8[%c0_19, %c0_20], %28 {strides = array<i32>} : memref<8x8xf32, #tpu.memory_space<vmem>>, vector<8x8xf32>,
    return
  }
  func.func @transform_0(%arg0: i32) -> (i32, i32) {
    %c0_i32 = arith.constant 0 : i32
    %c0_i32_0 = arith.constant 0 : i32
    return %arg0, %c0_i32 : i32, i32
  }
  func.func @transform_1(%arg0: i32) -> (i32, i32) {
    %c0_i32 = arith.constant 0 : i32
    %c0_i32_0 = arith.constant 0 : i32
    %c0_i32_1 = arith.constant 0 : i32
    return %c0_i32, %c0_i32_0 : i32, i32
  }
  func.func @transform_2(%arg0: i32) -> (i32, i32) {
    %c0_i32 = arith.constant 0 : i32
    %c0_i32_0 = arith.constant 0 : i32
    %c0_i32_1 = arith.constant 0 : i32
    return %c0_i32, %c0_i32_0 : i32, i32
  }
  func.func @transform_3(%arg0: i32) -> (i32, i32) {
    %c0_i32 = arith.constant 0 : i32
    %c0_i32_0 = arith.constant 0 : i32
    %c0_i32_1 = arith.constant 0 : i32
    return %c0_i32, %c0_i32_0 : i32, i32
  }
  func.func @transform_4(%arg0: i32) -> (i32, i32) {
    %c0_i32 = arith.constant 0 : i32
    %c0_i32_0 = arith.constant 0 : i32
    %c0_i32_1 = arith.constant 0 : i32
    return %c0_i32, %c0_i32_0 : i32, i32
  }
  func.func @transform_5(%arg0: i32) -> (i32, i32) {
    %c0_i32 = arith.constant 0 : i32
    %c0_i32_0 = arith.constant 0 : i32
    %c0_i32_1 = arith.constant 0 : i32
    return %c0_i32, %c0_i32_0 : i32, i32
  }
  func.func @transform_6(%arg0: i32) -> (i32, i32) {
    %c0_i32 = arith.constant 0 : i32
    %c0_i32_0 = arith.constant 0 : i32
    %c0_i32_1 = arith.constant 0 : i32
    return %c0_i32, %c0_i32_0 : i32, i32
  }
  func.func @transform_7(%arg0: i32) -> (i32, i32) {
    %c0_i32 = arith.constant 0 : i32
    %c0_i32_0 = arith.constant 0 : i32
    return %arg0, %c0_i32 : i32, i32
  }
}

</mosaic_0001>

<llo_original>
// kernel: tpu_custom_call.1
$region0: #{tpu_custom_call.1}
  #allocation0 [shape = 'u32[]', space=smem, size = 0x4, offset = 0x4, fixed_abs, tag = 'smem constant byte address 0x4 - core index']
  #allocation1 [shape = 'u32[144,128]{1,0:T(1,128)}', space=vmem, size = 0x12000, scoped, tag = 'internal scratch']
  %s0 = inlined_call_operand.vmem [shape: f32[8,32], index: 0, kind: input, shape index: {}]
  %s1 = inlined_call_operand.vmem [shape: f32[32,32], index: 1, kind: input, shape index: {}]
  %s2 = inlined_call_operand.vmem [shape: f32[1,32], index: 2, kind: input, shape index: {}]
  %s3 = inlined_call_operand.hbm [shape: f32[32,32], index: 3, kind: input, shape index: {}]
  %s4 = inlined_call_operand.hbm [shape: f32[1,32], index: 4, kind: input, shape index: {}]
  %s5 = inlined_call_operand.vmem [shape: f32[32,8], index: 5, kind: input, shape index: {}]
  %s6 = inlined_call_operand.vmem [shape: f32[1,8], index: 6, kind: input, shape index: {}]
  %s7 = inlined_call_operand.hbm [shape: f32[8,8], index: 7, kind: output, shape index: {}]
  %s8 = sld [smem:[#allocation0]]
  $region46: #{tpu_custom_call.1} parent=0
    _
  %s10 = ssub.s32 1, %s8
  %s11 = scalar_select 0, %s10, %s8
  $region1: #{tpu_custom_call.1} parent=0
    #allocation2 [shape = 'u8[16384]{0}', space=vmem, size = 0x4000, scoped, tag = 'input window, operand 3, single buffered']
    #allocation3 [shape = 's32[1]{0}', space=sflag, size = 0x4, scoped, tag = 'scoped memory for tpu_custom_call.1']
    #allocation4 [shape = 's32[1]{0}', space=sflag, size = 0x4, scoped, tag = 'scoped memory for tpu_custom_call.1']
    #allocation5 [shape = 'u8[512]{0}', space=vmem, size = 0x400, scoped, tag = 'input window, operand 4, single buffered']
    #allocation6 [shape = 's32[1]{0}', space=sflag, size = 0x4, scoped, tag = 'scoped memory for tpu_custom_call.1']
    #allocation7 [shape = 'u8[4096]{0}', space=vmem, size = 0x1000, scoped, tag = 'output window, operand 0, single buffered']
    %12 = vsyncpa [#allocation3], 0
    %13 = vsyncpa [#allocation6], 0
    %14 = vsyncpa [#allocation4], 0
    // Predicated region
    $region2: #{tpu_custom_call.1} parent=1 // pred_check
      _
    $region3: #{tpu_custom_call.1} parent=1 // pred_check_branch
      %16 = sbr.rel (0) target = $region5
    $region4: #{tpu_custom_call.1} parent=1 // pred_region
      _
    $region5: #{tpu_custom_call.1} parent=1 // pred_fallthru
      _
    // Predicated region
    $region6: #{tpu_custom_call.1} parent=1 // pred_check
      _
    $region7: #{tpu_custom_call.1} parent=1 // pred_check_branch
      %18 = sbr.rel (0) target = $region9
    $region8: #{tpu_custom_call.1} parent=1 // pred_region
      _
    $region9: #{tpu_custom_call.1} parent=1 // pred_fallthru
      _
    // Predicated region
    $region10: #{tpu_custom_call.1} parent=1 // pred_check
      _
    $region11: #{tpu_custom_call.1} parent=1 // pred_check_branch
      %20 = sbr.rel (0) target = $region13
    $region12: #{tpu_custom_call.1} parent=1 // pred_region
      _
    $region13: #{tpu_custom_call.1} parent=1 // pred_fallthru
      _
    // Predicated region
    $region14: #{tpu_custom_call.1} parent=1 // pred_check
      _
    $region15: #{tpu_custom_call.1} parent=1 // pred_check_branch
      %22 = sbr.rel (0) target = $region17
    $region16: #{tpu_custom_call.1} parent=1 // pred_region
      %s24 = ssub.s32 512, 512
      %25 = vsyncadd [#allocation3], %s24
      %s26 = sshll.u32 [#allocation2], 4
      %s27 = int_to_ptr.vmem [resolvable:$true] %s26
      %32 = dma.hbm_to_vmem [thread:$0]  %s3, 512, %s27, [#allocation3], 128, 128, 8
    $region17: #{tpu_custom_call.1} parent=1 // pred_fallthru
      _
    // Predicated region
    $region18: #{tpu_custom_call.1} parent=1 // pred_check
      _
    $region19: #{tpu_custom_call.1} parent=1 // pred_check_branch
      %34 = sbr.rel (0) target = $region21
    $region20: #{tpu_custom_call.1} parent=1 // pred_region
      %s36 = ssub.s32 16, 16
      %37 = vsyncadd [#allocation6], %s36
      %s39 = sshll.u32 [#allocation5], 4
      %s40 = int_to_ptr.vmem [resolvable:$true] %s39
      %42 = dma.hbm_to_vmem [thread:$0]  %s4, 16, %s40, [#allocation6]
    $region21: #{tpu_custom_call.1} parent=1 // pred_fallthru
      _
    // Predicated region
    $region22: #{tpu_custom_call.1} parent=1 // pred_check
      _
    $region23: #{tpu_custom_call.1} parent=1 // pred_check_branch
      %44 = sbr.rel (0) target = $region25
    $region24: #{tpu_custom_call.1} parent=1 // pred_region
      _
    $region25: #{tpu_custom_call.1} parent=1 // pred_fallthru
      _
    // Predicated region
    $region26: #{tpu_custom_call.1} parent=1 // pred_check
      _
    $region27: #{tpu_custom_call.1} parent=1 // pred_check_branch
      %46 = sbr.rel (0) target = $region29
    $region28: #{tpu_custom_call.1} parent=1 // pred_region
      _
    $region29: #{tpu_custom_call.1} parent=1 // pred_fallthru
      _
    // Predicated region
    $region30: #{tpu_custom_call.1} parent=1 // pred_check
      _
    $region31: #{tpu_custom_call.1} parent=1 // pred_check_branch
      %48 = sbr.rel (0) target = $region33
    $region32: #{tpu_custom_call.1} parent=1 // pred_region
      %49 = dma.done [#allocation3], 512
    $region33: #{tpu_custom_call.1} parent=1 // pred_fallthru
      _
    // Predicated region
    $region34: #{tpu_custom_call.1} parent=1 // pred_check
      _
    $region35: #{tpu_custom_call.1} parent=1 // pred_check_branch
      %51 = sbr.rel (0) target = $region37
    $region36: #{tpu_custom_call.1} parent=1 // pred_region
      %52 = dma.done [#allocation6], 16
    $region37: #{tpu_custom_call.1} parent=1 // pred_fallthru
      _
    %v53 = vld [vmem:[%s0] sm:$0xff]
    %v54 = vld [vmem:[%s1] sm:$0xff]
    %v55 = vld [vmem:[%s1 + $0x8] sm:$0xff]
    %v56 = vld [vmem:[%s1 + $0x10] sm:$0xff]
    %v57 = vld [vmem:[%s1 + $0x18] sm:$0xff]
    %v58 = vld [vmem:[%s2] sm:$0x1]
    %v60 = vlaneseq
    %v61 = vshrl.u32 %v60, 7
    %v62 = vsub.s32 0, %v61
    %v63 = vrot.slane %v58, %v62
    %vm65 = vcmask 261120
    %v67 = vsel %vm65, %v53, 0
    %69 = vmatprep.subr.mxu0 0.0
    %70 = vmatpush1.msra.mxu0 0.0
    %71 = vmatprep.subr.mxu0 0.0
    %72 = vmatpush1.msra.mxu0 0.0
    %73 = vmatprep.subr.mxu0 0.0
    %74 = vmatpush1.msra.mxu0 0.0
    %75 = vmatprep.subr.mxu0 0.0
    %76 = vmatpush1.msra.mxu0 0.0
    %77 = vmatprep.subr.mxu0 0.0
    %78 = vmatpush1.msra.mxu0 0.0
    %79 = vmatprep.subr.mxu0 0.0
    %80 = vmatpush1.msra.mxu0 0.0
    %81 = vmatprep.subr.mxu0 0.0
    %82 = vmatpush1.msra.mxu0 0.0
    %83 = vmatprep.subr.mxu0 0.0
    %84 = vmatpush1.msra.mxu0 0.0
    %85 = vmatprep.subr.mxu0 0.0
    %86 = vmatpush1.msra.mxu0 0.0
    %87 = vmatprep.subr.mxu0 0.0
    %88 = vmatpush1.msra.mxu0 0.0
    %89 = vmatprep.subr.mxu0 0.0
    %90 = vmatpush1.msra.mxu0 0.0
    %91 = vmatprep.subr.mxu0 0.0
    %92 = vmatpush1.msra.mxu0 0.0
    %93 = vmatprep.subr.mxu0 0.0
    %94 = vmatpush1.msra.mxu0 %v57
    %95 = vmatprep.subr.mxu0 0.0
    %96 = vmatpush1.msra.mxu0 %v56
    %97 = vmatprep.subr.mxu0 0.0
    %98 = vmatpush1.msra.mxu0 %v55
    %99 = vmatprep.subr.mxu0 0.0
    %100 = vmatpush1.msra.mxu0 %v54
    %101 = vmatprep.subr.mxu0 0.0
    %102 = vmatpush2.msra.mxu0 0.0
    %103 = vmatprep.subr.mxu0 0.0
    %104 = vmatpush2.msra.mxu0 0.0
    %105 = vmatprep.subr.mxu0 0.0
    %106 = vmatpush2.msra.mxu0 0.0
    %107 = vmatprep.subr.mxu0 0.0
    %108 = vmatpush2.msra.mxu0 0.0
    %109 = vmatprep.subr.mxu0 0.0
    %110 = vmatpush2.msra.mxu0 0.0
    %111 = vmatprep.subr.mxu0 0.0
    %112 = vmatpush2.msra.mxu0 0.0
    %113 = vmatprep.subr.mxu0 0.0
    %114 = vmatpush2.msra.mxu0 0.0
    %115 = vmatprep.subr.mxu0 0.0
    %116 = vmatpush2.msra.mxu0 0.0
    %117 = vmatprep.subr.mxu0 0.0
    %118 = vmatpush2.msra.mxu0 0.0
    %119 = vmatprep.subr.mxu0 0.0
    %120 = vmatpush2.msra.mxu0 0.0
    %121 = vmatprep.subr.mxu0 0.0
    %122 = vmatpush2.msra.mxu0 0.0
    %123 = vmatprep.subr.mxu0 0.0
    %124 = vmatpush2.msra.mxu0 0.0
    %125 = vmatprep.subr.mxu0 0.0
    %126 = vmatpush2.msra.mxu0 0.0
    %127 = vmatprep.subr.mxu0 0.0
    %128 = vmatpush2.msra.mxu0 0.0
    %129 = vmatprep.subr.mxu0 0.0
    %130 = vmatpush2.msra.mxu0 0.0
    %131 = vmatprep.subr.mxu0 0.0
    %132 = vmatpush2.msra.mxu0 0.0
    %133 = vmatprep.mubr.f32.mxu0 0.0
    %134 = vmatmul.mubr.f32.gmra.mxu0 %v67
    %v135 = vpop.f32.mrf.mxu0
    %v136 = vadd.f32 %v63, %v135
    %v137 = vpop.f32.mrf.mxu0
    %138 = vdwg.mxu0
    %v139 = vmax.f32 %v136, 0.0
    %v140 = vld [vmem:[#allocation2] sm:$0xff]
    %v141 = vld [vmem:[#allocation2 + $0x8] sm:$0xff]
    %v142 = vld [vmem:[#allocation2 + $0x10] sm:$0xff]
    %v143 = vld [vmem:[#allocation2 + $0x18] sm:$0xff]
    %v144 = vld [vmem:[#allocation5] sm:$0x1]
    %v146 = vlaneseq
    %v147 = vshrl.u32 %v146, 7
    %v148 = vsub.s32 0, %v147
    %v149 = vrot.slane %v144, %v148
    %v152 = vsel %vm65, %v139, 0
    %154 = vmatprep.subr.mxu0 0.0
    %155 = vmatpush1.msra.mxu0 0.0
    %156 = vmatprep.subr.mxu0 0.0
    %157 = vmatpush1.msra.mxu0 0.0
    %158 = vmatprep.subr.mxu0 0.0
    %159 = vmatpush1.msra.mxu0 0.0
    %160 = vmatprep.subr.mxu0 0.0
    %161 = vmatpush1.msra.mxu0 0.0
    %162 = vmatprep.subr.mxu0 0.0
    %163 = vmatpush1.msra.mxu0 0.0
    %164 = vmatprep.subr.mxu0 0.0
    %165 = vmatpush1.msra.mxu0 0.0
    %166 = vmatprep.subr.mxu0 0.0
    %167 = vmatpush1.msra.mxu0 0.0
    %168 = vmatprep.subr.mxu0 0.0
    %169 = vmatpush1.msra.mxu0 0.0
    %170 = vmatprep.subr.mxu0 0.0
    %171 = vmatpush1.msra.mxu0 0.0
    %172 = vmatprep.subr.mxu0 0.0
    %173 = vmatpush1.msra.mxu0 0.0
    %174 = vmatprep.subr.mxu0 0.0
    %175 = vmatpush1.msra.mxu0 0.0
    %176 = vmatprep.subr.mxu0 0.0
    %177 = vmatpush1.msra.mxu0 0.0
    %178 = vmatprep.subr.mxu0 0.0
    %179 = vmatpush1.msra.mxu0 %v143
    %180 = vmatprep.subr.mxu0 0.0
    %181 = vmatpush1.msra.mxu0 %v142
    %182 = vmatprep.subr.mxu0 0.0
    %183 = vmatpush1.msra.mxu0 %v141
    %184 = vmatprep.subr.mxu0 0.0
    %185 = vmatpush1.msra.mxu0 %v140
    %186 = vmatprep.subr.mxu0 0.0
    %187 = vmatpush2.msra.mxu0 0.0
    %188 = vmatprep.subr.mxu0 0.0
    %189 = vmatpush2.msra.mxu0 0.0
    %190 = vmatprep.subr.mxu0 0.0
    %191 = vmatpush2.msra.mxu0 0.0
    %192 = vmatprep.subr.mxu0 0.0
    %193 = vmatpush2.msra.mxu0 0.0
    %194 = vmatprep.subr.mxu0 0.0
    %195 = vmatpush2.msra.mxu0 0.0
    %196 = vmatprep.subr.mxu0 0.0
    %197 = vmatpush2.msra.mxu0 0.0
    %198 = vmatprep.subr.mxu0 0.0
    %199 = vmatpush2.msra.mxu0 0.0
    %200 = vmatprep.subr.mxu0 0.0
    %201 = vmatpush2.msra.mxu0 0.0
    %202 = vmatprep.subr.mxu0 0.0
    %203 = vmatpush2.msra.mxu0 0.0
    %204 = vmatprep.subr.mxu0 0.0
    %205 = vmatpush2.msra.mxu0 0.0
    %206 = vmatprep.subr.mxu0 0.0
    %207 = vmatpush2.msra.mxu0 0.0
    %208 = vmatprep.subr.mxu0 0.0
    %209 = vmatpush2.msra.mxu0 0.0
    %210 = vmatprep.subr.mxu0 0.0
    %211 = vmatpush2.msra.mxu0 0.0
    %212 = vmatprep.subr.mxu0 0.0
    %213 = vmatpush2.msra.mxu0 0.0
    %214 = vmatprep.subr.mxu0 0.0
    %215 = vmatpush2.msra.mxu0 0.0
    %216 = vmatprep.subr.mxu0 0.0
    %217 = vmatpush2.msra.mxu0 0.0
    %218 = vmatprep.mubr.f32.mxu0 0.0
    %219 = vmatmul.mubr.f32.gmra.mxu0 %v152
    %v220 = vpop.f32.mrf.mxu0
    %v221 = vadd.f32 %v149, %v220
    %v222 = vpop.f32.mrf.mxu0
    %223 = vdwg.mxu0
    %v224 = vmax.f32 %v221, 0.0
    %v225 = vld [vmem:[%s5] sm:$0xff]
    %v226 = vld [vmem:[%s5 + $0x8] sm:$0xff]
    %v227 = vld [vmem:[%s5 + $0x10] sm:$0xff]
    %v228 = vld [vmem:[%s5 + $0x18] sm:$0xff]
    %v229 = vld [vmem:[%s6] sm:$0x1]
    %v231 = vlaneseq
    %v232 = vshrl.u32 %v231, 7
    %v233 = vsub.s32 0, %v232
    %v234 = vrot.slane %v229, %v233
    %v237 = vsel %vm65, %v224, 0
    %239 = vmatprep.subr.mxu0 0.0
    %240 = vmatpush1.msra.mxu0 0.0
    %241 = vmatprep.subr.mxu0 0.0
    %242 = vmatpush1.msra.mxu0 0.0
    %243 = vmatprep.subr.mxu0 0.0
    %244 = vmatpush1.msra.mxu0 0.0
    %245 = vmatprep.subr.mxu0 0.0
    %246 = vmatpush1.msra.mxu0 0.0
    %247 = vmatprep.subr.mxu0 0.0
    %248 = vmatpush1.msra.mxu0 0.0
    %249 = vmatprep.subr.mxu0 0.0
    %250 = vmatpush1.msra.mxu0 0.0
    %251 = vmatprep.subr.mxu0 0.0
    %252 = vmatpush1.msra.mxu0 0.0
    %253 = vmatprep.subr.mxu0 0.0
    %254 = vmatpush1.msra.mxu0 0.0
    %255 = vmatprep.subr.mxu0 0.0
    %256 = vmatpush1.msra.mxu0 0.0
    %257 = vmatprep.subr.mxu0 0.0
    %258 = vmatpush1.msra.mxu0 0.0
    %259 = vmatprep.subr.mxu0 0.0
    %260 = vmatpush1.msra.mxu0 0.0
    %261 = vmatprep.subr.mxu0 0.0
    %262 = vmatpush1.msra.mxu0 0.0
    %263 = vmatprep.subr.mxu0 0.0
    %264 = vmatpush1.msra.mxu0 %v228
    %265 = vmatprep.subr.mxu0 0.0
    %266 = vmatpush1.msra.mxu0 %v227
    %267 = vmatprep.subr.mxu0 0.0
    %268 = vmatpush1.msra.mxu0 %v226
    %269 = vmatprep.subr.mxu0 0.0
    %270 = vmatpush1.msra.mxu0 %v225
    %271 = vmatprep.subr.mxu0 0.0
    %272 = vmatpush2.msra.mxu0 0.0
    %273 = vmatprep.subr.mxu0 0.0
    %274 = vmatpush2.msra.mxu0 0.0
    %275 = vmatprep.subr.mxu0 0.0
    %276 = vmatpush2.msra.mxu0 0.0
    %277 = vmatprep.subr.mxu0 0.0
    %278 = vmatpush2.msra.mxu0 0.0
    %279 = vmatprep.subr.mxu0 0.0
    %280 = vmatpush2.msra.mxu0 0.0
    %281 = vmatprep.subr.mxu0 0.0
    %282 = vmatpush2.msra.mxu0 0.0
    %283 = vmatprep.subr.mxu0 0.0
    %284 = vmatpush2.msra.mxu0 0.0
    %285 = vmatprep.subr.mxu0 0.0
    %286 = vmatpush2.msra.mxu0 0.0
    %287 = vmatprep.subr.mxu0 0.0
    %288 = vmatpush2.msra.mxu0 0.0
    %289 = vmatprep.subr.mxu0 0.0
    %290 = vmatpush2.msra.mxu0 0.0
    %291 = vmatprep.subr.mxu0 0.0
    %292 = vmatpush2.msra.mxu0 0.0
    %293 = vmatprep.subr.mxu0 0.0
    %294 = vmatpush2.msra.mxu0 0.0
    %295 = vmatprep.subr.mxu0 0.0
    %296 = vmatpush2.msra.mxu0 0.0
    %297 = vmatprep.subr.mxu0 0.0
    %298 = vmatpush2.msra.mxu0 0.0
    %299 = vmatprep.subr.mxu0 0.0
    %300 = vmatpush2.msra.mxu0 0.0
    %301 = vmatprep.subr.mxu0 0.0
    %302 = vmatpush2.msra.mxu0 0.0
    %303 = vmatprep.mubr.f32.mxu0 0.0
    %304 = vmatmul.mubr.f32.gmra.mxu0 %v237
    %v305 = vpop.f32.mrf.mxu0
    %v306 = vadd.f32 %v234, %v305
    %v307 = vpop.f32.mrf.mxu0
    %308 = vdwg.mxu0
    %vm309 = vcmask 64512
    %v310 = vsel %vm309, %v306, -inf
    %311 = vmax.xlane.f32.xlu0 %v310
    %v312 = vpop.xlane.xlu0 %311
    %v313 = vsub.f32 %v306, %v312
    %v314 = vmul.f32 %v313, 1.442695
    %v315 = vpow.pop %v314
    %v316 = vsel %vm309, %v315, 0.0
    %317 = vadd.xlane.f32.xlu0 %v316
    %v318 = vpop.xlane.xlu0 %317
    %v319 = vrcp.pop %v318
    %v320 = vmul.f32 %v315, %v319
    %321 = vst.msk [vmem:[#allocation7] sm:$0xff] %vm309, %v320
    // Predicated region
    $region38: #{tpu_custom_call.1} parent=1 // pred_check
      _
    $region39: #{tpu_custom_call.1} parent=1 // pred_check_branch
      %323 = sbr.rel (0) target = $region41
    $region40: #{tpu_custom_call.1} parent=1 // pred_region
      %s325 = ssub.s32 128, 128
      %326 = vsyncadd [#allocation4], %s325
      %s328 = sshll.u32 [#allocation7], 4
      %s329 = int_to_ptr.vmem [resolvable:$true] %s328
      %331 = dma.vmem_to_hbm [thread:$0]  %s329, 128, %s7, [#allocation4]
    $region41: #{tpu_custom_call.1} parent=1 // pred_fallthru
      _
    // Predicated region
    $region42: #{tpu_custom_call.1} parent=1 // pred_check
      _
    $region43: #{tpu_custom_call.1} parent=1 // pred_check_branch
      %333 = sbr.rel (0) target = $region45
    $region44: #{tpu_custom_call.1} parent=1 // pred_region
      %334 = dma.done [#allocation4], 128
    $region45: #{tpu_custom_call.1} parent=1 // pred_fallthru
      _
    %335 = vsyncpa [#allocation3], 1
    %336 = vsyncpa [#allocation6], 1
    %337 = vsyncpa [#allocation4], 1

</llo_original>
